<compile_context>
chip_gen: v5e
topology: v5e:2x2
jax: 0.10.0
libtpu: 0.0.40
codegen_flags: <defaults>
</compile_context>

<pallas_src>
import jax
import jax.numpy as jnp
from jax.experimental import pallas as pl
from jax.experimental.pallas import tpu as pltpu


_LANES = 512           # wide, multiple of 128 -> unmasked vector stores
_MAX_TILE_ROWS = 1024  # 1024 x 512 x 4B = 2 MiB per f32 buffer


def _round_up(a: int, b: int) -> int:
    return ((a + b - 1) // b) * b


def _binarize_kernel(x_ref, o_ref):
    x = x_ref[...]
    one = jnp.ones((), dtype=x.dtype)
    # sign binarization: x >= 0 -> +1, x < 0 -> -1
    o_ref[...] = jnp.where(x >= 0, one, -one)


def _binarize_2d(x2d: jnp.ndarray, tile_r: int) -> jnp.ndarray:
    rows, lanes = x2d.shape
    return pl.pallas_call(
        _binarize_kernel,
        out_shape=jax.ShapeDtypeStruct((rows, lanes), x2d.dtype),
        grid_spec=pltpu.PrefetchScalarGridSpec(
            num_scalar_prefetch=0,
            grid=(rows // tile_r,),
            in_specs=[pl.BlockSpec((tile_r, lanes), lambda i: (i, 0))],
            out_specs=pl.BlockSpec((tile_r, lanes), lambda i: (i, 0)),
        ),
        compiler_params=pltpu.CompilerParams(
            dimension_semantics=("parallel",),
        ),
    )(x2d)


@jax.jit
def binarize(x: jnp.ndarray) -> jnp.ndarray:
    """Elementwise sign binarization (any shape) via a tiled Pallas TPU kernel."""
    orig_shape = x.shape
    total = int(x.size)  # static under jit

    # Sublane granularity depends on dtype packing: f32 -> 8, bf16 -> 16, int8 -> 32.
    itemsize = jnp.dtype(x.dtype).itemsize
    sub = max(8, 32 // itemsize)

    rows_needed = pl.cdiv(total, _LANES)
    tile_r = min(_MAX_TILE_ROWS, _round_up(rows_needed, sub))
    rows = _round_up(rows_needed, tile_r)
    padded_total = rows * _LANES

    xf = x.reshape(-1)
    needs_pad = padded_total != total
    if needs_pad:
        xf = jnp.pad(xf, (0, padded_total - total))

    out2d = _binarize_2d(xf.reshape(rows, _LANES), tile_r)

    if needs_pad:
        return out2d.reshape(-1)[:total].reshape(orig_shape)
    return out2d.reshape(orig_shape)


if __name__ == "__main__":
    key = jax.random.PRNGKey(0)

    # Small NCHW input consistent with a conv-style binarizer: batch=2, C=4, 16x16.
    x = jax.random.normal(key, (2, 4, 16, 16), dtype=jnp.float32)
    y = jax.block_until_ready(binarize(x))
    ref = jnp.where(x >= 0, 1.0, -1.0).astype(x.dtype)
    assert y.shape == x.shape and y.dtype == x.dtype
    assert bool(jnp.all(y == ref))

    # Also exercise the padding path with a non-multiple-of-128 element count (2*3*7*7).
    x_odd = jax.random.normal(jax.random.PRNGKey(1), (2, 3, 7, 7), dtype=jnp.float32)
    y_odd = jax.block_until_ready(binarize(x_odd))
    ref_odd = jnp.where(x_odd >= 0, 1.0, -1.0).astype(x_odd.dtype)
    assert y_odd.shape == x_odd.shape and y_odd.dtype == x_odd.dtype
    assert bool(jnp.all(y_odd == ref_odd))

    print("KERNEL_OK")
</pallas_src>

<mosaic_0001>
module attributes {stable_mosaic.version = 11 : i64} {
  func.func @_binarize_kernel(%arg0: i32, %arg1: memref<8x512xf32, #tpu.memory_space<vmem>>, %arg2: memref<8x512xf32, #tpu.memory_space<vmem>>) attributes {dimension_semantics = [#tpu.dimension_semantics<parallel>], iteration_bounds = array<i64: 1>, scalar_prefetch = 0 : i64, scratch_operands = 0 : i64, tpu.core_type = #tpu.core_type<tc>, window_params = [{transform_indices = @transform_0, window_bounds = array<i64: 8, 512>}, {transform_indices = @transform_1, window_bounds = array<i64: 8, 512>}]} {
    %c0 = arith.constant 0 : index
    %c0_0 = arith.constant 0 : index
    %0 = vector.load %arg1[%c0, %c0_0] : memref<8x512xf32, #tpu.memory_space<vmem>>, vector<8x512xf32>
    %cst = arith.constant 0.000000e+00 : f32
    %1 = vector.broadcast %cst : f32 to vector<8x512xf32>
    %2 = arith.cmpf oge, %0, %1 : vector<8x512xf32>
    %cst_1 = arith.constant 0.000000e+00 : f32
    %cst_2 = arith.constant 1.000000e+00 : f32
    %3 = arith.subf %cst_1, %cst_2 : f32
    %cst_3 = arith.constant 1.000000e+00 : f32
    %4 = vector.broadcast %cst_3 : f32 to vector<8x512xf32>
    %5 = vector.broadcast %3 : f32 to vector<8x512xf32>
    %6 = arith.select %2, %4, %5 : vector<8x512xi1>, vector<8x512xf32>
    %c0_4 = arith.constant 0 : index
    %c0_5 = arith.constant 0 : index
    %7 = vector.load %arg2[%c0_4, %c0_5] : memref<8x512xf32, #tpu.memory_space<vmem>>, vector<8x512xf32>
    tpu.vector_store %arg2[%c0_4, %c0_5], %6 {strides = array<i32>} : memref<8x512xf32, #tpu.memory_space<vmem>>, vector<8x512xf32>,
    return
  }
  func.func @transform_0(%arg0: i32) -> (i32, i32) {
    %c0_i32 = arith.constant 0 : i32
    %c0_i32_0 = arith.constant 0 : i32
    return %arg0, %c0_i32 : i32, i32
  }
  func.func @transform_1(%arg0: i32) -> (i32, i32) {
    %c0_i32 = arith.constant 0 : i32
    %c0_i32_0 = arith.constant 0 : i32
    return %arg0, %c0_i32 : i32, i32
  }
}

</mosaic_0001>

<llo_original>
// kernel: binarize.1
$region0: #{binarize.1}
  #allocation0 [shape = 'u32[]', space=smem, size = 0x4, offset = 0x4, fixed_abs, tag = 'smem constant byte address 0x4 - core index']
  #allocation1 [shape = 'u32[72,128]{1,0:T(1,128)}', space=vmem, size = 0x9000, scoped, tag = 'internal scratch']
  %s0 = inlined_call_operand.vmem [shape: f32[8,512], index: 0, kind: input, shape index: {}]
  %s1 = inlined_call_operand.vmem [shape: f32[8,512], index: 1, kind: output, shape index: {}]
  %s2 = sld [smem:[#allocation0]]
  $region14: #{binarize.1} parent=0
    _
  %s4 = ssub.s32 1, %s2
  %s5 = scalar_select 0, %s4, %s2
  // Predicated region
  $region2: #{binarize.1} parent=0 // pred_check
    _
  $region3: #{binarize.1} parent=0 // pred_check_branch
    %7 = sbr.rel (0) target = $region5
  $region4: #{binarize.1} parent=0 // pred_region
    _
  $region5: #{binarize.1} parent=0 // pred_fallthru
    _
  %v8 = vld [vmem:[%s0] sm:$0xff]
  %v9 = vld [vmem:[%s0 + $0x8] sm:$0xff]
  %v10 = vld [vmem:[%s0 + $0x10] sm:$0xff]
  %v11 = vld [vmem:[%s0 + $0x18] sm:$0xff]
  %vm12 = vcmp.ge.f32.partialorder %v8, 0.0
  %vm13 = vcmp.ge.f32.partialorder %v9, 0.0
  %vm14 = vcmp.ge.f32.partialorder %v10, 0.0
  %vm15 = vcmp.ge.f32.partialorder %v11, 0.0
  %v16 = vsel %vm12, 1.0, -1.0
  %v17 = vsel %vm13, 1.0, -1.0
  %v18 = vsel %vm14, 1.0, -1.0
  %v19 = vsel %vm15, 1.0, -1.0
  %20 = vst [vmem:[%s1] sm:$0xff] %v16
  %21 = vst [vmem:[%s1 + $0x8] sm:$0xff] %v17
  %22 = vst [vmem:[%s1 + $0x10] sm:$0xff] %v18
  %23 = vst [vmem:[%s1 + $0x18] sm:$0xff] %v19
  // Predicated region
  $region6: #{binarize.1} parent=0 // pred_check
    _
  $region7: #{binarize.1} parent=0 // pred_check_branch
    %25 = sbr.rel (0) target = $region9
  $region8: #{binarize.1} parent=0 // pred_region
    _
  $region9: #{binarize.1} parent=0 // pred_fallthru
    _
  // Predicated region
  $region10: #{binarize.1} parent=0 // pred_check
    _
  $region11: #{binarize.1} parent=0 // pred_check_branch
    %27 = sbr.rel (0) target = $region13
  $region12: #{binarize.1} parent=0 // pred_region
    _
  $region13: #{binarize.1} parent=0 // pred_fallthru
    _

</llo_original>
